<compile_context>
chip_gen: v5e
topology: v5e:2x2
jax: 0.10.0
libtpu: 0.0.40
codegen_flags: <defaults>
</compile_context>

<pallas_src>
import jax
import jax.numpy as jnp
from jax.experimental import pallas as pl
from jax.experimental.pallas import tpu as pltpu


def _round_up(x, m):
    return (x + m - 1) // m * m


def _conv_bn_relu_kernel(x_ref, t_ref, sb_ref, o_ref):
    # x_ref:  (Nb, Hout, Kpad)   bf16  H-im2col activation slab (batch chunk)
    # t_ref:  (Kpad, Qpad)       bf16  fused block-Toeplitz weights
    # sb_ref: (2, Qpad)          f32   folded BN scale (row 0) / bias (row 1)
    # o_ref:  (Nb*Hout, Qpad)    f32   lane-dense output slab
    nb, hout, kpad = x_ref.shape
    xi = x_ref[...].reshape(nb * hout, kpad)            # leading-dim collapse only
    acc = jnp.dot(xi, t_ref[...], preferred_element_type=jnp.float32)  # one MXU push
    y = acc * sb_ref[0:1, :] + sb_ref[1:2, :]            # fused BN (eval), f32
    o_ref[...] = jnp.maximum(y, 0.0).astype(o_ref.dtype)  # ReLU + unmasked vst


def prepare_basic_conv2d_params(weight_oihw, gamma, beta, running_mean, running_var,
                                *, eps, h, w, padding):
    """Build the fused-K block-Toeplitz weight and folded BN scale/bias ONCE.

    Depends only on weights / BN params / static shapes -> parameter-load time,
    not the per-step forward path.
    """
    cout, cin, kh, kw = weight_oihw.shape
    hp, wp = h + 2 * padding, w + 2 * padding
    hout, wout = hp - kh + 1, wp - kw + 1
    wpc = wp * cin
    k = kh * wpc
    q = wout * cout
    kpad = _round_up(k, 128)      # full-lane contraction dim for the MXU
    qpad = _round_up(q, 128)      # lane-dense (unmasked-vst) output dim

    # T[i*Wp*Cin + (w+j)*Cin + c, w*Cout + o] = weight[o, c, i, j]; zeros elsewhere.
    w_ijco = jnp.transpose(weight_oihw, (2, 3, 1, 0)).astype(jnp.float32)  # (KH,KW,Cin,Cout)
    i_ar = jnp.arange(kh)[:, None, None, None, None]
    w_ar = jnp.arange(wout)[None, :, None, None, None]
    j_ar = jnp.arange(kw)[None, None, :, None, None]
    c_ar = jnp.arange(cin)[None, None, None, :, None]
    o_ar = jnp.arange(cout)[None, None, None, None, :]
    shp = (kh, wout, kw, cin, cout)
    rows = jnp.broadcast_to(i_ar * wpc + (w_ar + j_ar) * cin + c_ar, shp)
    cols = jnp.broadcast_to(w_ar * cout + o_ar, shp)
    vals = jnp.broadcast_to(w_ijco[:, None, :, :, :], shp)
    toe = jnp.zeros((kpad, qpad), jnp.float32).at[rows, cols].set(vals)
    toe = toe.astype(jnp.bfloat16)

    # Fold BatchNorm (eval mode, running stats) into per-lane scale/bias.
    # TODO(synk): training-mode BatchNorm (batch statistics) is not implemented.
    scale = (gamma / jnp.sqrt(running_var + eps)).astype(jnp.float32)
    bias = (beta - running_mean * scale).astype(jnp.float32)
    sb = jnp.stack([jnp.tile(scale, wout), jnp.tile(bias, wout)], axis=0)  # (2, q)
    sb = jnp.pad(sb, ((0, 0), (0, qpad - q)))

    meta = dict(cin=cin, cout=cout, kh=kh, kw=kw, hout=hout, wout=wout,
                hp=hp, wp=wp, kpad=kpad, qpad=qpad, padding=padding)
    return toe, sb, meta


def basic_conv2d_forward(x_nchw, toe, sb, meta, *, batch_block=None):
    n, cin, h, w = x_nchw.shape
    assert cin == meta["cin"]
    kh, hout, wout = meta["kh"], meta["hout"], meta["wout"]
    cout, kpad, qpad = meta["cout"], meta["kpad"], meta["qpad"]
    pad = meta["padding"]
    wpc = meta["wp"] * cin
    q = wout * cout

    # ---- layout plumbing (plain XLA, outside the kernel) ----
    # bf16 activations: halves HBM->VMEM DMA and removes in-kernel casts.
    x_nhwc = jnp.transpose(x_nchw, (0, 2, 3, 1)).astype(jnp.bfloat16)
    x_padded = jnp.pad(x_nhwc, ((0, 0), (pad, pad), (pad, pad), (0, 0)))
    x_rows = x_padded.reshape(n, meta["hp"], wpc)
    # H-im2col: fold the KH row taps into the contraction dim -> one MXU push.
    x_k = jnp.concatenate([x_rows[:, i:i + hout, :] for i in range(kh)], axis=-1)
    if kpad > kh * wpc:
        x_k = jnp.pad(x_k, ((0, 0), (0, 0), (0, kpad - kh * wpc)))

    # Per-step M = nb*hout: aim for >= 256 rows (MXU row utilization + per-step
    # overhead amortization) while keeping the grid a clean divisor of N.
    if batch_block is None:
        target = max(1, -(-256 // hout))
        nb = 1
        for cand in range(1, n + 1):
            if n % cand == 0 and cand * hout <= 1024:
                nb = cand
                if cand >= target:
                    break
        batch_block = nb
    nb = batch_block
    assert n % nb == 0

    out_rows = pl.pallas_call(
        _conv_bn_relu_kernel,
        out_shape=jax.ShapeDtypeStruct((n * hout, qpad), jnp.float32),
        grid=(n // nb,),
        in_specs=[
            pl.BlockSpec((nb, hout, kpad), lambda b: (b, 0, 0)),
            # TODO(synk): grid-invariant weight / sb operands could be
            # single-buffered (pl.Buffered(1)) once shapes grow; negligible here.
            pl.BlockSpec((kpad, qpad), lambda b: (0, 0)),
            pl.BlockSpec((2, qpad), lambda b: (0, 0)),
        ],
        out_specs=pl.BlockSpec((nb * hout, qpad), lambda b: (b, 0)),
        compiler_params=pltpu.CompilerParams(
            dimension_semantics=("parallel",),
            vmem_limit_bytes=32 * 1024 * 1024),
    )(x_k, toe, sb)

    # (N*Hout, Qpad) -> (N, Cout, Hout, Wout), dropping the lane padding.
    out = out_rows[:, :q].reshape(n, hout, wout, cout)
    return jnp.transpose(out, (0, 3, 1, 2))


def basic_conv2d(x_nchw, weight, gamma, beta, running_mean, running_var,
                 *, eps=1e-3, stride=1, padding=1, batch_block=None):
    """Conv2d(bias=False, stride=1) + BatchNorm2d(eval, eps) + ReLU."""
    assert stride == 1, "TODO(synk): only stride=1 (no dilation/groups) is implemented"
    n, cin, h, w = x_nchw.shape
    toe, sb, meta = prepare_basic_conv2d_params(
        weight, gamma, beta, running_mean, running_var,
        eps=eps, h=h, w=w, padding=padding)
    return basic_conv2d_forward(x_nchw, toe, sb, meta, batch_block=batch_block)


if __name__ == "__main__":
    # Shapes consistent with BasicConv2d(in_channels=4, out_channels=8,
    # kernel_size=3, padding=1) on a (2, 4, 16, 16) NCHW input.
    N, CIN, H, W = 2, 4, 16, 16
    COUT, KH, KW = 8, 3, 3
    PAD = 1
    EPS = 1e-3

    key = jax.random.PRNGKey(0)
    kx, kw_, kg, kb, km, kv = jax.random.split(key, 6)

    x = jax.random.normal(kx, (N, CIN, H, W), dtype=jnp.float32)
    weight = jax.random.normal(kw_, (COUT, CIN, KH, KW), dtype=jnp.float32) * 0.1
    gamma = jax.random.uniform(kg, (COUT,), minval=0.5, maxval=1.5, dtype=jnp.float32)
    beta = jax.random.normal(kb, (COUT,), dtype=jnp.float32) * 0.1
    running_mean = jax.random.normal(km, (COUT,), dtype=jnp.float32) * 0.1
    running_var = jax.random.uniform(kv, (COUT,), minval=0.5, maxval=1.5,
                                     dtype=jnp.float32)

    # Parameter prep (Toeplitz + folded BN) happens once, outside the hot path.
    toe, sb, meta = prepare_basic_conv2d_params(
        weight, gamma, beta, running_mean, running_var, eps=EPS, h=H, w=W, padding=PAD)

    out = basic_conv2d_forward(x, toe, sb, meta)
    out = jax.block_until_ready(out)

    # Pure-JAX reference with matching bf16 operand rounding and f32 accumulation.
    x_bf = x.astype(jnp.bfloat16).astype(jnp.float32)
    w_bf = weight.astype(jnp.bfloat16).astype(jnp.float32)
    ref = jax.lax.conv_general_dilated(
        x_bf, w_bf, window_strides=(1, 1), padding=((PAD, PAD), (PAD, PAD)),
        dimension_numbers=("NCHW", "OIHW", "NCHW"))
    scale_ref = gamma / jnp.sqrt(running_var + EPS)
    bias_ref = beta - running_mean * scale_ref
    ref = jnp.maximum(ref * scale_ref[None, :, None, None]
                      + bias_ref[None, :, None, None], 0.0)

    assert out.shape == (N, COUT, H, W)
    assert jnp.allclose(out, ref, atol=1e-3, rtol=1e-3), "mismatch vs reference"
    print("KERNEL_OK")
</pallas_src>

<mosaic_0001>
module attributes {stable_mosaic.version = 11 : i64} {
  func.func @_conv_bn_relu_kernel(%arg0: i32, %arg1: memref<2x16x256xbf16, #tpu.memory_space<vmem>>, %arg2: memref<256x128xbf16, #tpu.memory_space<vmem>>, %arg3: memref<2x128xf32, #tpu.memory_space<vmem>>, %arg4: memref<32x128xf32, #tpu.memory_space<vmem>>) attributes {dimension_semantics = [#tpu.dimension_semantics<parallel>], iteration_bounds = array<i64: 1>, scalar_prefetch = 0 : i64, scratch_operands = 0 : i64, tpu.core_type = #tpu.core_type<tc>, window_params = [{transform_indices = @transform_0, window_bounds = array<i64: 2, 16, 256>}, {pipeline_mode = #tpu.pipeline_mode<synchronous>, transform_indices = @transform_1, window_bounds = array<i64: 256, 128>}, {pipeline_mode = #tpu.pipeline_mode<synchronous>, transform_indices = @transform_2, window_bounds = array<i64: 2, 128>}, {transform_indices = @transform_3, window_bounds = array<i64: 32, 128>}]} {
    %c0 = arith.constant 0 : index
    %c0_0 = arith.constant 0 : index
    %c0_1 = arith.constant 0 : index
    %0 = vector.load %arg1[%c0, %c0_0, %c0_1] : memref<2x16x256xbf16, #tpu.memory_space<vmem>>, vector<2x16x256xbf16>
    %1 = vector.shape_cast %0 : vector<2x16x256xbf16> to vector<32x256xbf16>
    %c0_2 = arith.constant 0 : index
    %c0_3 = arith.constant 0 : index
    %2 = vector.load %arg2[%c0_2, %c0_3] : memref<256x128xbf16, #tpu.memory_space<vmem>>, vector<256x128xbf16>
    %cst = arith.constant dense<0.000000e+00> : vector<32x128xf32>
    %3 = tpu.matmul %1, %2, %cst {dimension_numbers = #tpu.dot_dimension_numbers<[1], [0], [0], [1], [0, 0, 1, 1], [], []>} : vector<32x256xbf16>, vector<256x128xbf16>, vector<32x128xf32> -> vector<32x128xf32>
    %c0_4 = arith.constant 0 : index
    %c0_5 = arith.constant 0 : index
    %4 = vector.load %arg3[%c0_4, %c0_5] : memref<2x128xf32, #tpu.memory_space<vmem>>, vector<1x128xf32>
    %5 = vector.broadcast %4 : vector<1x128xf32> to vector<32x128xf32>
    %6 = arith.mulf %3, %5 : vector<32x128xf32>
    %c1 = arith.constant 1 : index
    %c0_6 = arith.constant 0 : index
    %7 = vector.load %arg3[%c1, %c0_6] : memref<2x128xf32, #tpu.memory_space<vmem>>, vector<1x128xf32>
    %8 = vector.broadcast %7 : vector<1x128xf32> to vector<32x128xf32>
    %9 = arith.addf %6, %8 : vector<32x128xf32>
    %cst_7 = arith.constant 0.000000e+00 : f32
    %10 = vector.broadcast %cst_7 : f32 to vector<32x128xf32>
    %11 = arith.maximumf %9, %10 : vector<32x128xf32>
    %c0_8 = arith.constant 0 : index
    %c0_9 = arith.constant 0 : index
    %12 = vector.load %arg4[%c0_8, %c0_9] : memref<32x128xf32, #tpu.memory_space<vmem>>, vector<32x128xf32>
    tpu.vector_store %arg4[%c0_8, %c0_9], %11 {strides = array<i32>} : memref<32x128xf32, #tpu.memory_space<vmem>>, vector<32x128xf32>,
    return
  }
  func.func @transform_0(%arg0: i32) -> (i32, i32, i32) {
    %c0_i32 = arith.constant 0 : i32
    %c0_i32_0 = arith.constant 0 : i32
    %c0_i32_1 = arith.constant 0 : i32
    return %arg0, %c0_i32, %c0_i32_0 : i32, i32, i32
  }
  func.func @transform_1(%arg0: i32) -> (i32, i32) {
    %c0_i32 = arith.constant 0 : i32
    %c0_i32_0 = arith.constant 0 : i32
    %c0_i32_1 = arith.constant 0 : i32
    return %c0_i32, %c0_i32_0 : i32, i32
  }
  func.func @transform_2(%arg0: i32) -> (i32, i32) {
    %c0_i32 = arith.constant 0 : i32
    %c0_i32_0 = arith.constant 0 : i32
    %c0_i32_1 = arith.constant 0 : i32
    return %c0_i32, %c0_i32_0 : i32, i32
  }
  func.func @transform_3(%arg0: i32) -> (i32, i32) {
    %c0_i32 = arith.constant 0 : i32
    %c0_i32_0 = arith.constant 0 : i32
    return %arg0, %c0_i32 : i32, i32
  }
}

</mosaic_0001>

<llo_original>
// kernel: tpu_custom_call.1
$region0: #{tpu_custom_call.1}
  #allocation0 [shape = 'u32[]', space=smem, size = 0x4, offset = 0x4, fixed_abs, tag = 'smem constant byte address 0x4 - core index']
  #allocation1 [shape = 'u32[72,128]{1,0:T(1,128)}', space=vmem, size = 0x9000, scoped, tag = 'internal scratch']
  %s0 = inlined_call_operand.hbm [shape: bf16[2,16,256], index: 0, kind: input, shape index: {}]
  %s1 = inlined_call_operand.hbm [shape: bf16[256,128], index: 1, kind: input, shape index: {}]
  %s2 = inlined_call_operand.hbm [shape: f32[2,128], index: 2, kind: input, shape index: {}]
  %s3 = inlined_call_operand.hbm [shape: f32[32,128], index: 3, kind: output, shape index: {}]
  %s4 = sld [smem:[#allocation0]]
  $region34: #{tpu_custom_call.1} parent=0
    _
  %s6 = ssub.s32 1, %s4
  %s7 = scalar_select 0, %s6, %s4
  $region1: #{tpu_custom_call.1} parent=0
    #allocation2 [shape = 'u8[16384]{0}', space=vmem, size = 0x4000, scoped, tag = 'input window, operand 0, single buffered']
    #allocation3 [shape = 's32[1]{0}', space=sflag, size = 0x4, scoped, tag = 'scoped memory for tpu_custom_call.1']
    #allocation4 [shape = 's32[1]{0}', space=sflag, size = 0x4, scoped, tag = 'scoped memory for tpu_custom_call.1']
    #allocation5 [shape = 'u8[65536]{0}', space=vmem, size = 0x10000, scoped, tag = 'input window, operand 1, single buffered']
    #allocation6 [shape = 's32[1]{0}', space=sflag, size = 0x4, scoped, tag = 'scoped memory for tpu_custom_call.1']
    #allocation7 [shape = 'u8[1024]{0}', space=vmem, size = 0x400, scoped, tag = 'input window, operand 2, single buffered']
    #allocation8 [shape = 'u8[16384]{0}', space=vmem, size = 0x4000, scoped, tag = 'output window, operand 0, single buffered']
    %8 = vsyncpa [#allocation3], 0
    %9 = vsyncpa [#allocation6], 0
    %10 = vsyncpa [#allocation4], 0
    // Predicated region
    $region2: #{tpu_custom_call.1} parent=1 // pred_check
      _
    $region3: #{tpu_custom_call.1} parent=1 // pred_check_branch
      %12 = sbr.rel (0) target = $region5
    $region4: #{tpu_custom_call.1} parent=1 // pred_region
      %14 = vsyncadd [#allocation3], 0
      %s15 = sshll.u32 %s0, 4
      %s16 = int_to_ptr.hbm [resolvable:$true] %s15
      %s17 = sshll.u32 [#allocation2], 4
      %s18 = int_to_ptr.vmem [resolvable:$true] %s17
      %23 = dma.hbm_to_vmem [thread:$0]  %s16, 512, %s18, [#allocation3], 128, 128, 8
    $region5: #{tpu_custom_call.1} parent=1 // pred_fallthru
      _
    // Predicated region
    $region6: #{tpu_custom_call.1} parent=1 // pred_check
      _
    $region7: #{tpu_custom_call.1} parent=1 // pred_check_branch
      %25 = sbr.rel (0) target = $region9
    $region8: #{tpu_custom_call.1} parent=1 // pred_region
      %27 = vsyncadd [#allocation6], 0
      %s28 = sshll.u32 %s1, 4
      %s29 = int_to_ptr.hbm [resolvable:$true] %s28
      %s30 = sshll.u32 [#allocation5], 4
      %s31 = int_to_ptr.vmem [resolvable:$true] %s30
      %36 = dma.hbm_to_vmem [thread:$0]  %s29, 2048, %s31, [#allocation6], 64, 64, 4
    $region9: #{tpu_custom_call.1} parent=1 // pred_fallthru
      _
    // Predicated region
    $region10: #{tpu_custom_call.1} parent=1 // pred_check
      _
    $region11: #{tpu_custom_call.1} parent=1 // pred_check_branch
      %38 = sbr.rel (0) target = $region13
    $region12: #{tpu_custom_call.1} parent=1 // pred_region
      %40 = vsyncadd [#allocation6], 0
      %s42 = sshll.u32 %s2, 4
      %s43 = int_to_ptr.hbm [resolvable:$true] %s42
      %s44 = sshll.u32 [#allocation7], 4
      %s45 = int_to_ptr.vmem [resolvable:$true] %s44
      %47 = dma.hbm_to_vmem [thread:$0]  %s43, 32, %s45, [#allocation6]
    $region13: #{tpu_custom_call.1} parent=1 // pred_fallthru
      _
    // Predicated region
    $region14: #{tpu_custom_call.1} parent=1 // pred_check
      _
    $region15: #{tpu_custom_call.1} parent=1 // pred_check_branch
      %49 = sbr.rel (0) target = $region17
    $region16: #{tpu_custom_call.1} parent=1 // pred_region
      %51 = dma.done [#allocation3], 512
    $region17: #{tpu_custom_call.1} parent=1 // pred_fallthru
      _
    // Predicated region
    $region18: #{tpu_custom_call.1} parent=1 // pred_check
      _
    $region19: #{tpu_custom_call.1} parent=1 // pred_check_branch
      %53 = sbr.rel (0) target = $region21
    $region20: #{tpu_custom_call.1} parent=1 // pred_region
      %55 = dma.done [#allocation6], 2048
    $region21: #{tpu_custom_call.1} parent=1 // pred_fallthru
      _
    // Predicated region
    $region22: #{tpu_custom_call.1} parent=1 // pred_check
      _
    $region23: #{tpu_custom_call.1} parent=1 // pred_check_branch
      %57 = sbr.rel (0) target = $region25
    $region24: #{tpu_custom_call.1} parent=1 // pred_region
      %59 = dma.done [#allocation6], 32
    $region25: #{tpu_custom_call.1} parent=1 // pred_fallthru
      _
    %v60 = vld [vmem:[#allocation2] sm:$0xff]
    %v61 = vld [vmem:[#allocation2 + $0x8] sm:$0xff]
    %v62 = vld [vmem:[#allocation2 + $0x10] sm:$0xff]
    %v63 = vld [vmem:[#allocation2 + $0x18] sm:$0xff]
    %v64 = vld [vmem:[#allocation5] sm:$0xf]
    %v65 = vld [vmem:[#allocation5 + $0x4] sm:$0xf]
    %v66 = vld [vmem:[#allocation5 + $0x8] sm:$0xf]
    %v67 = vld [vmem:[#allocation5 + $0xc] sm:$0xf]
    %v68 = vld [vmem:[#allocation5 + $0x10] sm:$0xf]
    %v69 = vld [vmem:[#allocation5 + $0x14] sm:$0xf]
    %v70 = vld [vmem:[#allocation5 + $0x18] sm:$0xf]
    %v71 = vld [vmem:[#allocation5 + $0x1c] sm:$0xf]
    %v72 = vld [vmem:[#allocation5 + $0x20] sm:$0xf]
    %v73 = vld [vmem:[#allocation5 + $0x24] sm:$0xf]
    %v74 = vld [vmem:[#allocation5 + $0x28] sm:$0xf]
    %v75 = vld [vmem:[#allocation5 + $0x2c] sm:$0xf]
    %v76 = vld [vmem:[#allocation5 + $0x30] sm:$0xf]
    %v77 = vld [vmem:[#allocation5 + $0x34] sm:$0xf]
    %v78 = vld [vmem:[#allocation5 + $0x38] sm:$0xf]
    %v79 = vld [vmem:[#allocation5 + $0x3c] sm:$0xf]
    %v80 = vld [vmem:[#allocation5 + $0x40] sm:$0xf]
    %v81 = vld [vmem:[#allocation5 + $0x44] sm:$0xf]
    %v82 = vld [vmem:[#allocation5 + $0x48] sm:$0xf]
    %v83 = vld [vmem:[#allocation5 + $0x4c] sm:$0xf]
    %v84 = vld [vmem:[#allocation5 + $0x50] sm:$0xf]
    %v85 = vld [vmem:[#allocation5 + $0x54] sm:$0xf]
    %v86 = vld [vmem:[#allocation5 + $0x58] sm:$0xf]
    %v87 = vld [vmem:[#allocation5 + $0x5c] sm:$0xf]
    %v88 = vld [vmem:[#allocation5 + $0x60] sm:$0xf]
    %v89 = vld [vmem:[#allocation5 + $0x64] sm:$0xf]
    %v90 = vld [vmem:[#allocation5 + $0x68] sm:$0xf]
    %v91 = vld [vmem:[#allocation5 + $0x6c] sm:$0xf]
    %v92 = vld [vmem:[#allocation5 + $0x70] sm:$0xf]
    %v93 = vld [vmem:[#allocation5 + $0x74] sm:$0xf]
    %v94 = vld [vmem:[#allocation5 + $0x78] sm:$0xf]
    %v95 = vld [vmem:[#allocation5 + $0x7c] sm:$0xf]
    %v100 = vunpack.c.l.b16 %v60
    %v101 = vunpack.c.h.b16 %v60
    %v102 = vunpack.c.l.b16 %v61
    %v103 = vunpack.c.h.b16 %v61
    %v104 = vunpack.c.l.b16 %v62
    %v105 = vunpack.c.h.b16 %v62
    %v106 = vunpack.c.l.b16 %v63
    %v107 = vunpack.c.h.b16 %v63
    %v108 = vpack.c.b16 %v102, %v100
    %v109 = vpack.c.b16 %v103, %v101
    %v110 = vpack.c.b16 %v106, %v104
    %v111 = vpack.c.b16 %v107, %v105
    %v148 = vunpack.c.l.b16 %v64
    %v149 = vunpack.c.l.b16 %v65
    %v150 = vunpack.c.l.b16 %v66
    %v151 = vunpack.c.l.b16 %v67
    %v152 = vunpack.c.l.b16 %v68
    %v153 = vunpack.c.l.b16 %v69
    %v154 = vunpack.c.l.b16 %v70
    %v155 = vunpack.c.l.b16 %v71
    %v156 = vunpack.c.l.b16 %v72
    %v157 = vunpack.c.l.b16 %v73
    %v158 = vunpack.c.l.b16 %v74
    %v159 = vunpack.c.l.b16 %v75
    %v160 = vunpack.c.l.b16 %v76
    %v161 = vunpack.c.l.b16 %v77
    %v162 = vunpack.c.l.b16 %v78
    %v163 = vunpack.c.l.b16 %v79
    %v164 = vunpack.c.l.b16 %v80
    %v165 = vunpack.c.l.b16 %v81
    %v166 = vunpack.c.l.b16 %v82
    %v167 = vunpack.c.l.b16 %v83
    %v168 = vunpack.c.l.b16 %v84
    %v169 = vunpack.c.l.b16 %v85
    %v170 = vunpack.c.l.b16 %v86
    %v171 = vunpack.c.l.b16 %v87
    %v172 = vunpack.c.l.b16 %v88
    %v173 = vunpack.c.l.b16 %v89
    %v174 = vunpack.c.l.b16 %v90
    %v175 = vunpack.c.l.b16 %v91
    %v176 = vunpack.c.l.b16 %v92
    %v177 = vunpack.c.l.b16 %v93
    %v178 = vunpack.c.l.b16 %v94
    %v179 = vunpack.c.l.b16 %v95
    %v180 = vpack.c.b16 %v149, %v148
    %v181 = vpack.c.b16 %v151, %v150
    %v182 = vpack.c.b16 %v153, %v152
    %v183 = vpack.c.b16 %v155, %v154
    %v184 = vpack.c.b16 %v157, %v156
    %v185 = vpack.c.b16 %v159, %v158
    %v186 = vpack.c.b16 %v161, %v160
    %v187 = vpack.c.b16 %v163, %v162
    %v188 = vpack.c.b16 %v165, %v164
    %v189 = vpack.c.b16 %v167, %v166
    %v190 = vpack.c.b16 %v169, %v168
    %v191 = vpack.c.b16 %v171, %v170
    %v192 = vpack.c.b16 %v173, %v172
    %v193 = vpack.c.b16 %v175, %v174
    %v194 = vpack.c.b16 %v177, %v176
    %v195 = vpack.c.b16 %v179, %v178
    %212 = vmatpush.bf16.msra.mxu0 %v187
    %213 = vmatpush.bf16.msra.mxu0 %v186
    %214 = vmatpush.bf16.msra.mxu0 %v185
    %215 = vmatpush.bf16.msra.mxu0 %v184
    %216 = vmatpush.bf16.msra.mxu0 %v183
    %217 = vmatpush.bf16.msra.mxu0 %v182
    %218 = vmatpush.bf16.msra.mxu0 %v181
    %219 = vmatpush.bf16.msra.mxu0 %v180
    %220 = vmatmul.bf16.gmra.mxu0 %v108
    %v221 = vpop.f32.mrf.mxu0
    %v222 = vadd.f32 0.0, %v221
    %v223 = vpop.f32.mrf.mxu0
    %v224 = vadd.f32 0.0, %v223
    %225 = vmatmul.bf16.gmra.mxu0 %v110
    %v226 = vpop.f32.mrf.mxu0
    %v227 = vadd.f32 0.0, %v226
    %v228 = vpop.f32.mrf.mxu0
    %v229 = vadd.f32 0.0, %v228
    %230 = vdwg.mxu0
    %231 = vmatpush.bf16.msra.mxu0 %v195
    %232 = vmatpush.bf16.msra.mxu0 %v194
    %233 = vmatpush.bf16.msra.mxu0 %v193
    %234 = vmatpush.bf16.msra.mxu0 %v192
    %235 = vmatpush.bf16.msra.mxu0 %v191
    %236 = vmatpush.bf16.msra.mxu0 %v190
    %237 = vmatpush.bf16.msra.mxu0 %v189
    %238 = vmatpush.bf16.msra.mxu0 %v188
    %239 = vmatmul.bf16.gmra.mxu0 %v109
    %v240 = vpop.f32.mrf.mxu0
    %v241 = vadd.f32 %v222, %v240
    %v242 = vpop.f32.mrf.mxu0
    %v243 = vadd.f32 %v224, %v242
    %244 = vmatmul.bf16.gmra.mxu0 %v111
    %v245 = vpop.f32.mrf.mxu0
    %v246 = vadd.f32 %v227, %v245
    %v247 = vpop.f32.mrf.mxu0
    %v248 = vadd.f32 %v229, %v247
    %249 = vdwg.mxu0
    %v250 = vld [vmem:[#allocation7] sm:$0x1]
    %v251 = vperm.slane %v250, 0
    %v252 = vmul.f32 %v241, %v251
    %v253 = vmul.f32 %v243, %v251
    %v254 = vmul.f32 %v246, %v251
    %v255 = vmul.f32 %v248, %v251
    %v256 = vld [vmem:[#allocation7 + $0x1] sm:$0x1]
    %v257 = vperm.slane %v256, 0
    %v258 = vadd.f32 %v252, %v257
    %v259 = vadd.f32 %v253, %v257
    %v260 = vadd.f32 %v254, %v257
    %v261 = vadd.f32 %v255, %v257
    %v262 = vmax.f32 %v258, 0.0
    %v263 = vmax.f32 %v259, 0.0
    %v264 = vmax.f32 %v260, 0.0
    %v265 = vmax.f32 %v261, 0.0
    %266 = vst [vmem:[#allocation8] sm:$0xff] %v262
    %267 = vst [vmem:[#allocation8 + $0x8] sm:$0xff] %v263
    %268 = vst [vmem:[#allocation8 + $0x10] sm:$0xff] %v264
    %269 = vst [vmem:[#allocation8 + $0x18] sm:$0xff] %v265
    // Predicated region
    $region26: #{tpu_custom_call.1} parent=1 // pred_check
      _
    $region27: #{tpu_custom_call.1} parent=1 // pred_check_branch
      %271 = sbr.rel (0) target = $region29
    $region28: #{tpu_custom_call.1} parent=1 // pred_region
      %273 = vsyncadd [#allocation4], 0
      %s274 = sshll.u32 [#allocation8], 4
      %s275 = int_to_ptr.vmem [resolvable:$true] %s274
      %s276 = sshll.u32 %s3, 4
      %s277 = int_to_ptr.hbm [resolvable:$true] %s276
      %282 = dma.vmem_to_hbm [thread:$0]  %s275, 512, %s277, [#allocation4], 128, 128, 8
    $region29: #{tpu_custom_call.1} parent=1 // pred_fallthru
      _
    // Predicated region
    $region30: #{tpu_custom_call.1} parent=1 // pred_check
      _
    $region31: #{tpu_custom_call.1} parent=1 // pred_check_branch
      %284 = sbr.rel (0) target = $region33
    $region32: #{tpu_custom_call.1} parent=1 // pred_region
      %286 = dma.done [#allocation4], 512
    $region33: #{tpu_custom_call.1} parent=1 // pred_fallthru
      _
    %287 = vsyncpa [#allocation3], 1
    %288 = vsyncpa [#allocation6], 1
    %289 = vsyncpa [#allocation4], 1

</llo_original>
